<compile_context>
chip_gen: v7x
topology: tpu7x:2x2x1
jax: 0.10.0
libtpu: 0.0.40
codegen_flags: <defaults>
</compile_context>

<pallas_src>
import collections

import jax
import jax.numpy as jnp
from jax.experimental import pallas as pl
from jax.experimental.pallas import tpu as pltpu


# -----------------------------------------------------------------------------
# Kernel
# -----------------------------------------------------------------------------
def highway_kernel(x_ref, w_ref, b_ref, o_ref):
    tn = o_ref.shape[-1]
    j = pl.program_id(1)                     # output-column tile index
    x = x_ref[...]                           # [tm, D] rows (input dtype)
    # One fused MXU pass per column tile: [tm, D] @ [D, 2*tn] -> [tm, 2*tn], f32 acc.
    ht = jnp.dot(x.astype(w_ref.dtype), w_ref[...],
                 preferred_element_type=jnp.float32)
    h = ht[:, :tn] + b_ref[...]              # H(x) columns; bias only on the H half
    t = jax.nn.sigmoid(ht[:, tn:])           # T(x) columns (EUP)
    # Carry path: matching x columns for this output tile (aligned dynamic slice).
    start = j * tn
    if tn % 128 == 0:
        start = pl.multiple_of(start, 128)
    x_cols = x_ref[:, pl.ds(start, tn)].astype(jnp.float32)
    # Highway combine: H*T + x*(1-T)  ==  x + T*(H - x)   (one fewer VPU multiply)
    # TODO(synk): if profiling shows vld/vst or spill pressure at large tm*tn, chunk
    # this epilogue over row sub-blocks with a short unrolled lax.fori_loop.
    o_ref[...] = (x_cols + t * (h - x_cols)).astype(o_ref.dtype)


# -----------------------------------------------------------------------------
# Setup-time helpers (run once, outside the hot path)
# -----------------------------------------------------------------------------
def _round_up(n, m):
    return ((n + m - 1) // m) * m


def _default_vmem_limit():
    cap = None
    try:
        cap = int(pltpu.get_tpu_info().vmem_capacity_bytes)
    except Exception:
        cap = None
    if cap is None:
        kind = ""
        try:
            kind = jax.devices()[0].device_kind.lower()
        except Exception:
            kind = ""
        cap = 64 * 1024 * 1024 if "v7" in kind else 128 * 1024 * 1024
    # Leave headroom below physical capacity for Mosaic internal scratch.
    if cap <= 64 * 1024 * 1024:       # v7x-class part
        return 40 * 1024 * 1024
    return 100 * 1024 * 1024          # v5e / v6e (128 MiB physical)


def _choose_tn(D, weight_itemsize, vmem_limit):
    """Output-column tile. tn == D means the whole [D, 2D] weight stays resident."""
    weight_budget = vmem_limit // 3
    if D * 2 * D * weight_itemsize <= weight_budget or D % 128 != 0:
        return D
    # Prefer multiples of 256 (v6e/v7x 2x256^2 MXU), fall back to 128 (enough on v5e).
    for step in (256, 128):
        cands = [t for t in range(step, D, step)
                 if D % t == 0 and D * 2 * t * weight_itemsize <= weight_budget]
        if cands:
            return max(cands)
    return 128  # best effort; vmem_limit still bounds the block


def _choose_tm(B, D, tn, x_dtype, w_dtype, out_dtype, vmem_limit, tm_max=1024):
    """Row tile from the per-generation VMEM budget, >=2 grid rows, minimal padding."""
    xb = jnp.dtype(x_dtype).itemsize
    ob = jnp.dtype(out_dtype).itemsize
    wb = jnp.dtype(w_dtype).itemsize
    # Conservative accounting: weight/bias counted double-buffered.
    fixed = 2 * (D * 2 * tn * wb) + 2 * (tn * 4)
    per_row = (2 * D * xb            # x input, double-buffered
               + 2 * tn * ob         # output, double-buffered
               + 4 * 2 * tn          # ht f32 intermediate
               + 4 * 3 * tn)         # h / t / x_cols f32 temps
    avail = max(vmem_limit - fixed, per_row * 8)
    tm_cap = max(8, min(tm_max, avail // per_row) // 8 * 8)
    B8 = _round_up(max(B, 1), 8)
    if B8 >= 16:  # keep >= 2 row-grid steps: pipeline overlap + v7x dual-TC sharding
        tm_cap = min(tm_cap, max(8, (B8 // 2) // 8 * 8))
    # Largest multiple-of-8 tile (<= cap) whose batch padding waste is small.
    allow = max(8, (B8 * 3 + 99) // 100)   # ~3% waste allowance, at least 8 rows
    tm = 8
    for t in range(8, tm_cap + 1, 8):
        if _round_up(B, t) - B <= allow:
            tm = t
    return tm


HighwayParams = collections.namedtuple("HighwayParams", ["w_packed", "b_packed", "tn"])


def pack_highway_params(w_h, b_h, w_t, *, matmul_dtype=jnp.bfloat16, tn=None,
                        vmem_limit_bytes=None):
    """One-time parameter packing (setup, NOT per forward call).

    w_h, w_t: PyTorch layout [D_out, D_in]; b_h: [D].
    Returns HighwayParams(w_packed [D, 2D], b_packed [1, D] f32, tn).
    Per column tile j, w_packed[:, j*2tn : (j+1)*2tn] = [ W_H^T cols | W_T^T cols ],
    so each output tile needs exactly one fused MXU pass.
    matmul_dtype: bf16 by default (f32 accumulation). Pass jnp.float32 for exact f32.
    # TODO(synk): on v7x, matmul_dtype=jnp.float8_e4m3fn halves weight VMEM/DMA again.
    """
    D = w_h.shape[0]
    assert w_h.shape == (D, D) and w_t.shape == (D, D) and b_h.shape == (D,)
    w_dtype = jnp.dtype(matmul_dtype) if matmul_dtype is not None else jnp.dtype(w_h.dtype)
    vmem_limit = vmem_limit_bytes or _default_vmem_limit()
    if tn is None:
        tn = _choose_tn(D, w_dtype.itemsize, vmem_limit)
    assert D % tn == 0
    n_tiles = D // tn
    wt_h = jnp.asarray(w_h).T.reshape(D, n_tiles, tn)
    wt_t = jnp.asarray(w_t).T.reshape(D, n_tiles, tn)
    w_packed = jnp.stack([wt_h, wt_t], axis=2).reshape(D, 2 * D).astype(w_dtype)
    b_packed = jnp.asarray(b_h, jnp.float32).reshape(1, D)
    return HighwayParams(w_packed, b_packed, int(tn))


# pallas_call construction (and the Buffered(1) capability probe) is done once per
# static configuration and cached; the forward path only does the cached call.
_CALL_CACHE = {}


def _build_highway_call(B_pad, D, tm, tn, x_dtype, w_dtype, out_dtype, vmem_limit):
    key = (B_pad, D, tm, tn, jnp.dtype(x_dtype).name, jnp.dtype(w_dtype).name,
           jnp.dtype(out_dtype).name, vmem_limit)
    fn = _CALL_CACHE.get(key)
    if fn is not None:
        return fn

    grid_m = B_pad // tm
    grid_n = D // tn
    resident_w = (grid_n == 1)   # whole packed weight fits; keep it resident

    def make(weight_kw):
        return pl.pallas_call(
            highway_kernel,
            out_shape=jax.ShapeDtypeStruct((B_pad, D), out_dtype),
            grid_spec=pltpu.PrefetchScalarGridSpec(
                num_scalar_prefetch=0,
                grid=(grid_m, grid_n),
                in_specs=[
                    pl.BlockSpec((tm, D), lambda i, j: (i, 0)),                 # x rows
                    pl.BlockSpec((D, 2 * tn), lambda i, j: (0, j), **weight_kw),  # weights
                    pl.BlockSpec((1, tn), lambda i, j: (0, j), **weight_kw),      # b_H cols
                ],
                out_specs=pl.BlockSpec((tm, tn), lambda i, j: (i, j)),
            ),
            compiler_params=pltpu.CompilerParams(
                dimension_semantics=("parallel", "arbitrary"),
                vmem_limit_bytes=vmem_limit,
            ),
        )

    x_sds = jax.ShapeDtypeStruct((B_pad, D), x_dtype)
    w_sds = jax.ShapeDtypeStruct((D, 2 * D), w_dtype)
    b_sds = jax.ShapeDtypeStruct((1, D), jnp.float32)

    fn = None
    if resident_w:
        # Single-buffer the constant weight/bias blocks (halves their VMEM footprint).
        try:
            cand = jax.jit(make({"pipeline_mode": pl.Buffered(1)}))
            cand.lower(x_sds, w_sds, b_sds)   # one-time lowering probe, no execution
            fn = cand
        except (pltpu.LoweringException, ValueError, TypeError, NotImplementedError):
            fn = None
    if fn is None:
        fn = jax.jit(make({}))   # streamed / default double-buffered weights
    _CALL_CACHE[key] = fn
    return fn


# -----------------------------------------------------------------------------
# Forward (hot path: no host syncs, no probes, no pallas_call construction)
# -----------------------------------------------------------------------------
def highway_forward(x, params, *, vmem_limit_bytes=None):
    """x: [B, D]; params from pack_highway_params."""
    w_packed, b_packed, tn = params
    B, D = x.shape
    assert w_packed.shape == (D, 2 * D)
    assert b_packed.shape == (1, D)
    assert D % tn == 0

    vmem_limit = vmem_limit_bytes or _default_vmem_limit()
    tm = _choose_tm(B, D, tn, x.dtype, w_packed.dtype, x.dtype, vmem_limit)
    B_pad = _round_up(B, tm)     # tm is chosen so B_pad - B stays small
    x_in = x if B_pad == B else jnp.pad(x, ((0, B_pad - B), (0, 0)))

    fn = _build_highway_call(B_pad, D, tm, tn, x.dtype, w_packed.dtype, x.dtype,
                             vmem_limit)
    out = fn(x_in, w_packed, b_packed)
    return out if B_pad == B else out[:B]


def highway_reference(x, w_h, b_h, w_t):
    h = x @ w_h.T + b_h
    t = jax.nn.sigmoid(x @ w_t.T)
    return h * t + x * (1.0 - t)


# -----------------------------------------------------------------------------
# Demo / correctness checks
# -----------------------------------------------------------------------------
if __name__ == "__main__":
    key = jax.random.PRNGKey(0)

    def make_case(k, B, D):
        kx, kwh, kbh, kwt = jax.random.split(k, 4)
        bound = float(D) ** -0.5   # nn.Linear default init bound
        x = jax.random.normal(kx, (B, D), dtype=jnp.float32)
        w_h = jax.random.uniform(kwh, (D, D), jnp.float32, minval=-bound, maxval=bound)
        b_h = jax.random.uniform(kbh, (D,), jnp.float32, minval=-bound, maxval=bound)
        w_t = jax.random.uniform(kwt, (D, D), jnp.float32, minval=-bound, maxval=bound)
        return x, w_h, b_h, w_t

    k1, k2 = jax.random.split(key)

    # --- case 1: B=16, D=128 (resident weights, grid_m >= 2) --------------------
    x, w_h, b_h, w_t = make_case(k1, 16, 128)
    ref = highway_reference(x, w_h, b_h, w_t)

    # f32-weight path (exact)
    p_f32 = pack_highway_params(w_h, b_h, w_t, matmul_dtype=jnp.float32)
    out_f32 = jax.block_until_ready(highway_forward(x, p_f32))
    assert out_f32.shape == (16, 128)
    assert jnp.allclose(out_f32, ref, atol=1e-4, rtol=1e-4), "f32 mismatch vs reference"

    # default bf16-weight path (f32 accumulation, f32 carry)
    p_bf16 = pack_highway_params(w_h, b_h, w_t)          # default matmul_dtype=bf16
    out_bf16 = jax.block_until_ready(highway_forward(x, p_bf16))
    xb = x.astype(jnp.bfloat16)
    h_b = jnp.dot(xb, w_h.T.astype(jnp.bfloat16),
                  preferred_element_type=jnp.float32) + b_h
    t_b = jax.nn.sigmoid(jnp.dot(xb, w_t.T.astype(jnp.bfloat16),
                                 preferred_element_type=jnp.float32))
    ref_bf16 = x + t_b * (h_b - x)
    assert jnp.allclose(out_bf16, ref_bf16, atol=2e-3, rtol=2e-3), "bf16 mismatch"

    # ragged batch (pad-to-8 + slice path)
    out_rag = jax.block_until_ready(highway_forward(x[:13], p_f32))
    assert out_rag.shape == (13, 128)
    assert jnp.allclose(out_rag, ref[:13], atol=1e-4, rtol=1e-4), "ragged mismatch"

    # --- case 2: B=24, D=256 with forced column tiling (tn=128, grid_n=2) -------
    x2, w_h2, b_h2, w_t2 = make_case(k2, 24, 256)
    ref2 = highway_reference(x2, w_h2, b_h2, w_t2)
    p_tiled = pack_highway_params(w_h2, b_h2, w_t2, matmul_dtype=jnp.float32, tn=128)
    out2 = jax.block_until_ready(highway_forward(x2, p_tiled))
    assert out2.shape == (24, 256)
    assert jnp.allclose(out2, ref2, atol=1e-4, rtol=1e-4), "column-tiled mismatch"

    print("KERNEL_OK")
</pallas_src>

<mosaic_0001>
module attributes {stable_mosaic.version = 11 : i64} {
  func.func @highway_kernel(%arg0: i32, %arg1: i32, %arg2: memref<8x128xf32, #tpu.memory_space<vmem>>, %arg3: memref<128x256xf32, #tpu.memory_space<vmem>>, %arg4: memref<1x128xf32, #tpu.memory_space<vmem>>, %arg5: memref<8x128xf32, #tpu.memory_space<vmem>>) attributes {dimension_semantics = [#tpu.dimension_semantics<parallel>, #tpu.dimension_semantics<arbitrary>], iteration_bounds = array<i64: 2, 1>, scalar_prefetch = 0 : i64, scratch_operands = 0 : i64, tpu.core_type = #tpu.core_type<tc>, window_params = [{transform_indices = @transform_0, window_bounds = array<i64: 8, 128>}, {transform_indices = @transform_1, window_bounds = array<i64: 128, 256>}, {transform_indices = @transform_2, window_bounds = array<i64: 1, 128>}, {transform_indices = @transform_3, window_bounds = array<i64: 8, 128>}]} {
    %c0 = arith.constant 0 : index
    %c0_0 = arith.constant 0 : index
    %0 = vector.load %arg2[%c0, %c0_0] : memref<8x128xf32, #tpu.memory_space<vmem>>, vector<8x128xf32>
    %c0_1 = arith.constant 0 : index
    %c0_2 = arith.constant 0 : index
    %1 = vector.load %arg3[%c0_1, %c0_2] : memref<128x256xf32, #tpu.memory_space<vmem>>, vector<128x256xf32>
    %cst = arith.constant dense<0.000000e+00> : vector<8x256xf32>
    %2 = tpu.matmul %0, %1, %cst {dimension_numbers = #tpu.dot_dimension_numbers<[1], [0], [0], [1], [0, 0, 1, 1], [], []>} : vector<8x128xf32>, vector<128x256xf32>, vector<8x256xf32> -> vector<8x256xf32>
    %3 = vector.extract_strided_slice %2 {offsets = [0, 0], sizes = [8, 128], strides = [1, 1]} : vector<8x256xf32> to vector<8x128xf32>
    %c0_3 = arith.constant 0 : index
    %c0_4 = arith.constant 0 : index
    %4 = vector.load %arg4[%c0_3, %c0_4] : memref<1x128xf32, #tpu.memory_space<vmem>>, vector<1x128xf32>
    %5 = vector.broadcast %4 : vector<1x128xf32> to vector<8x128xf32>
    %6 = arith.addf %3, %5 : vector<8x128xf32>
    %7 = vector.extract_strided_slice %2 {offsets = [0, 128], sizes = [8, 128], strides = [1, 1]} : vector<8x256xf32> to vector<8x128xf32>
    %8 = arith.negf %7 : vector<8x128xf32>
    %9 = math.exp %8 : vector<8x128xf32>
    %cst_5 = arith.constant 1.000000e+00 : f32
    %10 = vector.broadcast %cst_5 : f32 to vector<8x128xf32>
    %11 = arith.addf %10, %9 : vector<8x128xf32>
    %12 = arith.divf %10, %11 : vector<8x128xf32>
    %c128_i32 = arith.constant 128 : i32
    %13 = arith.muli %arg1, %c128_i32 : i32
    %14 = tpu.assume_multiple %13, 128 : i32
    %c0_6 = arith.constant 0 : index
    %15 = arith.index_cast %14 : i32 to index
    %16 = vector.load %arg2[%c0_6, %15] : memref<8x128xf32, #tpu.memory_space<vmem>>, vector<8x128xf32>
    %17 = arith.subf %6, %16 : vector<8x128xf32>
    %18 = arith.mulf %12, %17 : vector<8x128xf32>
    %19 = arith.addf %16, %18 : vector<8x128xf32>
    %c0_7 = arith.constant 0 : index
    %c0_8 = arith.constant 0 : index
    %20 = vector.load %arg5[%c0_7, %c0_8] : memref<8x128xf32, #tpu.memory_space<vmem>>, vector<8x128xf32>
    tpu.vector_store %arg5[%c0_7, %c0_8], %19 {strides = array<i32>} : memref<8x128xf32, #tpu.memory_space<vmem>>, vector<8x128xf32>,
    return
  }
  func.func @transform_0(%arg0: i32, %arg1: i32) -> (i32, i32) {
    %c0_i32 = arith.constant 0 : i32
    %c0_i32_0 = arith.constant 0 : i32
    return %arg0, %c0_i32 : i32, i32
  }
  func.func @transform_1(%arg0: i32, %arg1: i32) -> (i32, i32) {
    %c0_i32 = arith.constant 0 : i32
    %c0_i32_0 = arith.constant 0 : i32
    return %c0_i32, %arg1 : i32, i32
  }
  func.func @transform_2(%arg0: i32, %arg1: i32) -> (i32, i32) {
    %c0_i32 = arith.constant 0 : i32
    %c0_i32_0 = arith.constant 0 : i32
    return %c0_i32, %arg1 : i32, i32
  }
  func.func @transform_3(%arg0: i32, %arg1: i32) -> (i32, i32) {
    %c0_i32 = arith.constant 0 : i32
    return %arg0, %arg1 : i32, i32
  }
}

</mosaic_0001>

<llo_original>
// kernel: tpu_custom_call.1
$region0: #{tpu_custom_call.1}
  #allocation0 [shape = 'u32[]', space=smem, size = 0x4, offset = 0x4, fixed_abs, tag = 'smem constant byte address 0x4 - core index']
  #allocation1 [shape = 'u32[144,128]{1,0:T(1,128)}', space=vmem, size = 0x12000, scoped, tag = 'internal scratch']
  %s0 = inlined_call_operand.hbm [shape: f32[16,128], index: 0, kind: input, shape index: {}]
  %s1 = inlined_call_operand.hbm [shape: f32[128,256], index: 1, kind: input, shape index: {}]
  %s2 = inlined_call_operand.hbm [shape: f32[1,128], index: 2, kind: input, shape index: {}]
  %s3 = inlined_call_operand.hbm [shape: f32[16,128], index: 3, kind: output, shape index: {}]
  %s4 = sld [smem:[#allocation0]]
  $region57: #{tpu_custom_call.1} parent=0
    _
  %s6 = ssub.s32 1, %s4
  %s7 = scalar_select 0, %s6, %s4
  $region1: #{tpu_custom_call.1} parent=0
    #allocation2 [shape = 'u8[8192]{0}', space=vmem, size = 0x2000, scoped, tag = 'input window, operand 0']
    #allocation3 [shape = 's32[2]{0}', space=sflag, size = 0x8, scoped, tag = 'scoped memory for tpu_custom_call.1']
    #allocation4 [shape = 's32[2]{0}', space=sflag, size = 0x8, scoped, tag = 'scoped memory for tpu_custom_call.1']
    #allocation5 [shape = 'u8[131072]{0}', space=vmem, size = 0x20000, scoped, tag = 'input window, operand 1, single buffered']
    #allocation6 [shape = 's32[1]{0}', space=sflag, size = 0x4, scoped, tag = 'scoped memory for tpu_custom_call.1']
    #allocation7 [shape = 'u8[512]{0}', space=vmem, size = 0x400, scoped, tag = 'input window, operand 2, single buffered']
    #allocation8 [shape = 'u8[8192]{0}', space=vmem, size = 0x2000, scoped, tag = 'output window, operand 0']
    %8 = vsyncpa [#allocation3], 0
    %s9 = scalar_lea.sflag [#allocation3], 1
    %10 = vsyncpa %s9, 0
    %11 = vsyncpa [#allocation6], 0
    %12 = vsyncpa [#allocation4], 0
    %s13 = scalar_lea.sflag [#allocation4], 1
    %14 = vsyncpa %s13, 0
    loop: start=0, step=1, limit=4
    $region2: #{tpu_custom_call.1} parent=1 // loop_pre_header
      _
    $region3: #{tpu_custom_call.1} parent=1 // loop_header
      %s16 = sphi 0, %s20
      %p17 = scmp.ge.s32.totalorder %s16, 4
      %s23 = sphi 0, %s35
      %s24 = sphi 0, %s31
      %s25 = sphi 0, %s23
      %s26 = sphi 0, %s24
      %s27 = sphi 0, %s25
      %s28 = sphi 0, %s26
      %s38 = sphi 0, %s40
      %s41 = sphi 0, %s38
      %s42 = sphi 0, %s41
      %s58 = sphi 0, %s42
      %s64 = sphi 0, %s66
      %s67 = sphi 0, %s64
      %s68 = sphi 0, %s67
      %s84 = sphi 0, %s68
      %s90 = sphi 0, %s92
      %s93 = sphi 0, %s90
      %s94 = sphi 0, %s93
      %s110 = sphi 0, %s94
      %s118 = sphi 0, %s120
      %s121 = sphi 0, %s118
      %s122 = sphi 0, %s121
      %s138 = sphi 0, %s122
    $region4: #{tpu_custom_call.1} parent=1 // loop_header_branch
      %19 = sbr.rel (%p17) target = $region8
    $region5: #{tpu_custom_call.1} parent=1 // loop_body
      %s21 = ssub.s32 %s16, 1
      %s22 = ssub.s32 %s16, 2
      %s29 = sadd.s32 1, %s24
      %p30 = scmp.ge.s32.totalorder %s29, 1
      %s31 = scalar_select %p30, 0, %s29
      %s32 = sadd.s32 1, %s23
      %s33 = scalar_select %p30, %s32, %s23
      %p34 = scmp.ge.s32.totalorder %s33, 2
      %s35 = scalar_select %p34, 0, %s33
      %s36 = ssub.s32 %s23, %s35
      %p37 = scmp.eq.s32.totalorder %s36, 0
      %s39 = sadd.s32 %s38, 1
      %s40 = scalar_select %p37, %s38, %s39
      %p43 = pneg %p37
      %p44 = scmp.eq.s32.totalorder %s16, 1
      %p45 = por %p43, %p44
      %p46 = scmp.ne.s32.totalorder %s38, %s41
      %p47 = scmp.eq.s32.totalorder %s16, 0
      %p48 = por %p46, %p47
      %p49 = scmp.ne.s32.totalorder %s38, %s41
      %p50 = scmp.eq.s32.totalorder %s21, 1
      %p51 = por %p49, %p50
      %p52 = scmp.ne.s32.totalorder %s41, %s42
      %p53 = scmp.eq.s32.totalorder %s21, 0
      %p54 = por %p52, %p53
      %p55 = scmp.ne.s32.totalorder %s41, %s42
      %p56 = scmp.eq.s32.totalorder %s22, 1
      %p57 = por %p55, %p56
      %p59 = scmp.ne.s32.totalorder %s42, %s58
      %p60 = scmp.eq.s32.totalorder %s22, 0
      %p61 = por %p59, %p60
      %s62 = ssub.s32 %s24, %s31
      %p63 = scmp.eq.s32.totalorder %s62, 0
      %s65 = sadd.s32 %s64, 1
      %s66 = scalar_select %p63, %s64, %s65
      %p69 = pneg %p63
      %p70 = scmp.eq.s32.totalorder %s16, 1
      %p71 = por %p69, %p70
      %p72 = scmp.ne.s32.totalorder %s64, %s67
      %p73 = scmp.eq.s32.totalorder %s16, 0
      %p74 = por %p72, %p73
      %p75 = scmp.ne.s32.totalorder %s64, %s67
      %p76 = scmp.eq.s32.totalorder %s21, 1
      %p77 = por %p75, %p76
      %p78 = scmp.ne.s32.totalorder %s67, %s68
      %p79 = scmp.eq.s32.totalorder %s21, 0
      %p80 = por %p78, %p79
      %p81 = scmp.ne.s32.totalorder %s67, %s68
      %p82 = scmp.eq.s32.totalorder %s22, 1
      %p83 = por %p81, %p82
      %p85 = scmp.ne.s32.totalorder %s68, %s84
      %p86 = scmp.eq.s32.totalorder %s22, 0
      %p87 = por %p85, %p86
      %s88 = ssub.s32 %s24, %s31
      %p89 = scmp.eq.s32.totalorder %s88, 0
      %s91 = sadd.s32 %s90, 1
      %s92 = scalar_select %p89, %s90, %s91
      %p95 = pneg %p89
      %p96 = scmp.eq.s32.totalorder %s16, 1
      %p97 = por %p95, %p96
      %p98 = scmp.ne.s32.totalorder %s90, %s93
      %p99 = scmp.eq.s32.totalorder %s16, 0
      %p100 = por %p98, %p99
      %p101 = scmp.ne.s32.totalorder %s90, %s93
      %p102 = scmp.eq.s32.totalorder %s21, 1
      %p103 = por %p101, %p102
      %p104 = scmp.ne.s32.totalorder %s93, %s94
      %p105 = scmp.eq.s32.totalorder %s21, 0
      %p106 = por %p104, %p105
      %p107 = scmp.ne.s32.totalorder %s93, %s94
      %p108 = scmp.eq.s32.totalorder %s22, 1
      %p109 = por %p107, %p108
      %p111 = scmp.ne.s32.totalorder %s94, %s110
      %p112 = scmp.eq.s32.totalorder %s22, 0
      %p113 = por %p111, %p112
      %s114 = ssub.s32 %s23, %s35
      %s115 = ssub.s32 %s24, %s31
      %s116 = sor.u32 %s114, %s115
      %p117 = scmp.eq.s32.totalorder %s116, 0
      %s119 = sadd.s32 %s118, 1
      %s120 = scalar_select %p117, %s118, %s119
      %p123 = pneg %p117
      %p124 = scmp.eq.s32.totalorder %s16, 1
      %p125 = por %p123, %p124
      %p126 = scmp.ne.s32.totalorder %s118, %s121
      %p127 = scmp.eq.s32.totalorder %s16, 0
      %p128 = por %p126, %p127
      %p129 = scmp.ne.s32.totalorder %s118, %s121
      %p130 = scmp.eq.s32.totalorder %s21, 1
      %p131 = por %p129, %p130
      %p132 = scmp.ne.s32.totalorder %s121, %s122
      %p133 = scmp.eq.s32.totalorder %s21, 0
      %p134 = por %p132, %p133
      %p135 = scmp.ne.s32.totalorder %s121, %s122
      %p136 = scmp.eq.s32.totalorder %s22, 1
      %p137 = por %p135, %p136
      %p139 = scmp.ne.s32.totalorder %s122, %s138
      %p140 = scmp.eq.s32.totalorder %s22, 0
      %p141 = por %p139, %p140
      %p142 = scmp.le.s32.totalorder 1, %s16
      %p143 = scmp.lt.s32.totalorder %s16, 3
      %p144 = pnand %p142, %p143
      %p145 = pneg %p144
      // Predicated region
      $region9: #{tpu_custom_call.1} parent=5 // pred_check
        _
      $region10: #{tpu_custom_call.1} parent=5 // pred_check_branch
        %147 = sbr.rel (%p144) target = $region12
      $region11: #{tpu_custom_call.1} parent=5 // pred_region
        %s148 = ssub.s32 %s16, 1
        // Predicated region
        $region13: #{tpu_custom_call.1} parent=11 // pred_check
          %p149 = pneg %p80
        $region14: #{tpu_custom_call.1} parent=11 // pred_check_branch
          %151 = sbr.rel (%p149) target = $region16
        $region15: #{tpu_custom_call.1} parent=11 // pred_region
          %s152 = smul.u32 2, %s26
          %s154 = ssub.s32 4096, 4096
          %155 = vsyncadd [#allocation6], %s154
          %s156 = smul.addr %s152, 128
          %s157 = scalar_lea.hbm %s1, %s156
          %s158 = sshll.u32 [#allocation5], 4
          %s159 = int_to_ptr.vmem [resolvable:$true] %s158
          %164 = dma.hbm_to_vmem [thread:$0]  %s157, 4096, %s159, [#allocation6], 256, 256, 16
        $region16: #{tpu_custom_call.1} parent=11 // pred_fallthru
          _
        // Predicated region
        $region17: #{tpu_custom_call.1} parent=11 // pred_check
          %p165 = pneg %p106
        $region18: #{tpu_custom_call.1} parent=11 // pred_check_branch
          %167 = sbr.rel (%p165) target = $region20
        $region19: #{tpu_custom_call.1} parent=11 // pred_region
          %s169 = ssub.s32 16, 16
          %170 = vsyncadd [#allocation6], %s169
          %s171 = smul.addr %s26, 16
          %s172 = scalar_lea.hbm %s2, %s171
          %s174 = sshll.u32 [#allocation7], 4
          %s175 = int_to_ptr.vmem [resolvable:$true] %s174
          %177 = dma.hbm_to_vmem [thread:$0]  %s172, 16, %s175, [#allocation6]
        $region20: #{tpu_custom_call.1} parent=11 // pred_fallthru
          _
      $region12: #{tpu_custom_call.1} parent=5 // pred_fallthru
        _
      %p178 = scmp.lt.s32.totalorder %s16, 2
      // Predicated region
      $region21: #{tpu_custom_call.1} parent=5 // pred_check
        %p179 = pneg %p178
      $region22: #{tpu_custom_call.1} parent=5 // pred_check_branch
        %181 = sbr.rel (%p179) target = $region24
      $region23: #{tpu_custom_call.1} parent=5 // pred_region
        // Predicated region
        $region25: #{tpu_custom_call.1} parent=23 // pred_check
          %p182 = pneg %p48
        $region26: #{tpu_custom_call.1} parent=23 // pred_check_branch
          %184 = sbr.rel (%p182) target = $region28
        $region27: #{tpu_custom_call.1} parent=23 // pred_region
          %s185 = sand.u32 %s38, 1
          %s186 = scalar_lea.sflag [#allocation3], %s185
          %s187 = sand.u32 %s38, 1
          %s188 = smul.addr %s187, 8
          %s189 = scalar_lea.vmem [#allocation2], %s188
          %s191 = ssub.s32 128, 128
          %192 = vsyncadd %s186, %s191
          %s193 = smul.addr %s23, 128
          %s194 = scalar_lea.hbm %s0, %s193
          %s196 = sshll.u32 %s189, 4
          %s197 = int_to_ptr.vmem [resolvable:$true] %s196
          %199 = dma.hbm_to_vmem [thread:$0]  %s194, 128, %s197, %s186
        $region28: #{tpu_custom_call.1} parent=23 // pred_fallthru
          _
      $region24: #{tpu_custom_call.1} parent=5 // pred_fallthru
        _
      %p200 = scmp.le.s32.totalorder 1, %s16
      %p201 = scmp.lt.s32.totalorder %s16, 3
      %p202 = pnand %p200, %p201
      %p203 = pneg %p202
      // Predicated region
      $region29: #{tpu_custom_call.1} parent=5 // pred_check
        _
      $region30: #{tpu_custom_call.1} parent=5 // pred_check_branch
        %205 = sbr.rel (%p202) target = $region32
      $region31: #{tpu_custom_call.1} parent=5 // pred_region
        %s206 = ssub.s32 %s16, 1
        %s207 = sand.u32 %s41, 1
        %s208 = scalar_lea.sflag [#allocation3], %s207
        %s209 = sand.u32 %s41, 1
        %s210 = smul.addr %s209, 8
        %s211 = scalar_lea.vmem [#allocation2], %s210
        // Predicated region
        $region33: #{tpu_custom_call.1} parent=31 // pred_check
          %p212 = pneg %p54
        $region34: #{tpu_custom_call.1} parent=31 // pred_check_branch
          %214 = sbr.rel (%p212) target = $region36
        $region35: #{tpu_custom_call.1} parent=31 // pred_region
          %215 = dma.done %s208, 128
        $region36: #{tpu_custom_call.1} parent=31 // pred_fallthru
          _
        // Predicated region
        $region37: #{tpu_custom_call.1} parent=31 // pred_check
          %p216 = pneg %p80
        $region38: #{tpu_custom_call.1} parent=31 // pred_check_branch
          %218 = sbr.rel (%p216) target = $region40
        $region39: #{tpu_custom_call.1} parent=31 // pred_region
          %219 = dma.done [#allocation6], 4096
        $region40: #{tpu_custom_call.1} parent=31 // pred_fallthru
          _
        // Predicated region
        $region41: #{tpu_custom_call.1} parent=31 // pred_check
          %p220 = pneg %p106
        $region42: #{tpu_custom_call.1} parent=31 // pred_check_branch
          %222 = sbr.rel (%p220) target = $region44
        $region43: #{tpu_custom_call.1} parent=31 // pred_region
          %223 = dma.done [#allocation6], 16
        $region44: #{tpu_custom_call.1} parent=31 // pred_fallthru
          _
        %s224 = sand.u32 %s41, 1
        %s225 = scalar_lea.sflag [#allocation3], %s224
        %s226 = sand.u32 %s41, 1
        %s227 = smul.addr %s226, 8
        %s228 = scalar_lea.vmem [#allocation2], %s227
        %p229 = pneg %p54
        %p230 = pneg %p51
        %p231 = pneg %p80
        %p232 = pneg %p77
        %p233 = pneg %p106
        %p234 = pneg %p103
        %p235 = pneg %p134
        %p236 = pneg %p131
        %s237 = sand.u32 %s121, 1
        %s238 = scalar_lea.sflag [#allocation4], %s237
        %s239 = sand.u32 %s121, 1
        %s240 = smul.addr %s239, 8
        %s241 = scalar_lea.vmem [#allocation8], %s240
        %s242 = smul.u32 2, %s26
        %v243 = vld [vmem:[%s211] sm:$0xff]
        %v244 = vld [vmem:[#allocation5] sm:$0xff]
        %v245 = vld [vmem:[#allocation5 + $0x8] sm:$0xff]
        %v246 = vld [vmem:[#allocation5 + $0x10] sm:$0xff]
        %v247 = vld [vmem:[#allocation5 + $0x18] sm:$0xff]
        %v248 = vld [vmem:[#allocation5 + $0x20] sm:$0xff]
        %v249 = vld [vmem:[#allocation5 + $0x28] sm:$0xff]
        %v250 = vld [vmem:[#allocation5 + $0x30] sm:$0xff]
        %v251 = vld [vmem:[#allocation5 + $0x38] sm:$0xff]
        %v252 = vld [vmem:[#allocation5 + $0x40] sm:$0xff]
        %v253 = vld [vmem:[#allocation5 + $0x48] sm:$0xff]
        %v254 = vld [vmem:[#allocation5 + $0x50] sm:$0xff]
        %v255 = vld [vmem:[#allocation5 + $0x58] sm:$0xff]
        %v256 = vld [vmem:[#allocation5 + $0x60] sm:$0xff]
        %v257 = vld [vmem:[#allocation5 + $0x68] sm:$0xff]
        %v258 = vld [vmem:[#allocation5 + $0x70] sm:$0xff]
        %v259 = vld [vmem:[#allocation5 + $0x78] sm:$0xff]
        %v260 = vld [vmem:[#allocation5 + $0x80] sm:$0xff]
        %v261 = vld [vmem:[#allocation5 + $0x88] sm:$0xff]
        %v262 = vld [vmem:[#allocation5 + $0x90] sm:$0xff]
        %v263 = vld [vmem:[#allocation5 + $0x98] sm:$0xff]
        %v264 = vld [vmem:[#allocation5 + $0xa0] sm:$0xff]
        %v265 = vld [vmem:[#allocation5 + $0xa8] sm:$0xff]
        %v266 = vld [vmem:[#allocation5 + $0xb0] sm:$0xff]
        %v267 = vld [vmem:[#allocation5 + $0xb8] sm:$0xff]
        %v268 = vld [vmem:[#allocation5 + $0xc0] sm:$0xff]
        %v269 = vld [vmem:[#allocation5 + $0xc8] sm:$0xff]
        %v270 = vld [vmem:[#allocation5 + $0xd0] sm:$0xff]
        %v271 = vld [vmem:[#allocation5 + $0xd8] sm:$0xff]
        %v272 = vld [vmem:[#allocation5 + $0xe0] sm:$0xff]
        %v273 = vld [vmem:[#allocation5 + $0xe8] sm:$0xff]
        %v274 = vld [vmem:[#allocation5 + $0xf0] sm:$0xff]
        %v275 = vld [vmem:[#allocation5 + $0xf8] sm:$0xff]
        %276 = vmatprep.subr.mxu0 %v245
        %277 = vmatpush1.msra.mxu0 %v244
        %278 = vmatprep.subr.mxu0 %v247
        %279 = vmatpush1.msra.mxu0 %v246
        %280 = vmatprep.subr.mxu0 %v249
        %281 = vmatpush1.msra.mxu0 %v248
        %282 = vmatprep.subr.mxu0 %v251
        %283 = vmatpush1.msra.mxu0 %v250
        %284 = vmatprep.subr.mxu0 %v253
        %285 = vmatpush1.msra.mxu0 %v252
        %286 = vmatprep.subr.mxu0 %v255
        %287 = vmatpush1.msra.mxu0 %v254
        %288 = vmatprep.subr.mxu0 %v257
        %289 = vmatpush1.msra.mxu0 %v256
        %290 = vmatprep.subr.mxu0 %v259
        %291 = vmatpush1.msra.mxu0 %v258
        %292 = vmatprep.subr.mxu0 %v261
        %293 = vmatpush1.msra.mxu0 %v260
        %294 = vmatprep.subr.mxu0 %v263
        %295 = vmatpush1.msra.mxu0 %v262
        %296 = vmatprep.subr.mxu0 %v265
        %297 = vmatpush1.msra.mxu0 %v264
        %298 = vmatprep.subr.mxu0 %v267
        %299 = vmatpush1.msra.mxu0 %v266
        %300 = vmatprep.subr.mxu0 %v269
        %301 = vmatpush1.msra.mxu0 %v268
        %302 = vmatprep.subr.mxu0 %v271
        %303 = vmatpush1.msra.mxu0 %v270
        %304 = vmatprep.subr.mxu0 %v273
        %305 = vmatpush1.msra.mxu0 %v272
        %306 = vmatprep.subr.mxu0 %v275
        %307 = vmatpush1.msra.mxu0 %v274
        %308 = vmatprep.subr.mxu0 0.0
        %309 = vmatpush1.msra.mxu0 0.0
        %310 = vmatprep.subr.mxu0 0.0
        %311 = vmatpush1.msra.mxu0 0.0
        %312 = vmatprep.subr.mxu0 0.0
        %313 = vmatpush1.msra.mxu0 0.0
        %314 = vmatprep.subr.mxu0 0.0
        %315 = vmatpush1.msra.mxu0 0.0
        %316 = vmatprep.subr.mxu0 0.0
        %317 = vmatpush1.msra.mxu0 0.0
        %318 = vmatprep.subr.mxu0 0.0
        %319 = vmatpush1.msra.mxu0 0.0
        %320 = vmatprep.subr.mxu0 0.0
        %321 = vmatpush1.msra.mxu0 0.0
        %322 = vmatprep.subr.mxu0 0.0
        %323 = vmatpush1.msra.mxu0 0.0
        %324 = vmatprep.subr.mxu0 0.0
        %325 = vmatpush1.msra.mxu0 0.0
        %326 = vmatprep.subr.mxu0 0.0
        %327 = vmatpush1.msra.mxu0 0.0
        %328 = vmatprep.subr.mxu0 0.0
        %329 = vmatpush1.msra.mxu0 0.0
        %330 = vmatprep.subr.mxu0 0.0
        %331 = vmatpush1.msra.mxu0 0.0
        %332 = vmatprep.subr.mxu0 0.0
        %333 = vmatpush1.msra.mxu0 0.0
        %334 = vmatprep.subr.mxu0 0.0
        %335 = vmatpush1.msra.mxu0 0.0
        %336 = vmatprep.subr.mxu0 0.0
        %337 = vmatpush1.msra.mxu0 0.0
        %338 = vmatprep.subr.mxu0 0.0
        %339 = vmatpush1.msra.mxu0 0.0
        %340 = vmatprep.mubr.f32.mxu0 0.0
        %341 = vmatmul.mubr.f32.gmra.mrb[0].mxu0 %v243
        %v342 = vpop.f32.mrb[0].mxu0
        %v343 = vadd.f32 0.0, %v342
        %v344 = vpop.f32.mrb[0].mxu0
        %v345 = vadd.f32 0.0, %v344
        %346 = vdwg.mxu0
        %v347 = vld [vmem:[#allocation7] sm:$0x1]
        %v349 = vlaneseq
        %v350 = vshrl.u32 %v349, 7
        %v351 = vsub.s32 0, %v350
        %v352 = vrot.slane %v347, %v351
        %v354 = vadd.f32 %v343, %v352
        %v355 = vxor.u32 %v345, 2147483648
        %v356 = vmul.f32 %v355, 1.442695
        %v357 = vpow.pop %v356
        %v358 = vadd.f32 %v357, 1.0
        %v359 = vrcp.pop %v358
        %v360 = vmul.f32 1.0, %v359
        %s361 = smul.u32 %s26, 128
        %s362 = sshra.s32 %s361, 7
        %s363 = sand.u32 %s361, 127
        %s364 = scalar_lea.vmem %s211, %s362 [#allocation2]
        %v365 = vld [vmem:[%s364] sm:$0xff]
        %v366 = vsub.f32 %v354, %v365
        %v367 = vmul.f32 %v360, %v366
        %v368 = vadd.f32 %v365, %v367
        %369 = vst [vmem:[%s241] sm:$0xff] %v368
        %s370 = sand.u32 %s121, 1
        %s371 = scalar_lea.sflag [#allocation4], %s370
        %s372 = sand.u32 %s121, 1
        %s373 = smul.addr %s372, 8
        %s374 = scalar_lea.vmem [#allocation8], %s373
        // Predicated region
        $region45: #{tpu_custom_call.1} parent=31 // pred_check
          %p375 = pneg %p131
        $region46: #{tpu_custom_call.1} parent=31 // pred_check_branch
          %377 = sbr.rel (%p375) target = $region48
        $region47: #{tpu_custom_call.1} parent=31 // pred_region
          %s379 = ssub.s32 128, 128
          %380 = vsyncadd %s371, %s379
          %s381 = sadd.s32 %s26, %s25
          %s382 = smul.addr %s381, 128
          %s383 = scalar_lea.hbm %s3, %s382
          %s385 = sshll.u32 %s374, 4
          %s386 = int_to_ptr.vmem [resolvable:$true] %s385
          %388 = dma.vmem_to_hbm [thread:$0]  %s386, 128, %s383, %s371
        $region48: #{tpu_custom_call.1} parent=31 // pred_fallthru
          _
      $region32: #{tpu_custom_call.1} parent=5 // pred_fallthru
        _
      %p389 = scmp.le.s32.totalorder 2, %s16
      // Predicated region
      $region49: #{tpu_custom_call.1} parent=5 // pred_check
        %p390 = pneg %p389
      $region50: #{tpu_custom_call.1} parent=5 // pred_check_branch
        %392 = sbr.rel (%p390) target = $region52
      $region51: #{tpu_custom_call.1} parent=5 // pred_region
        %s393 = ssub.s32 %s16, 2
        // Predicated region
        $region53: #{tpu_custom_call.1} parent=51 // pred_check
          %p394 = pneg %p137
        $region54: #{tpu_custom_call.1} parent=51 // pred_check_branch
          %396 = sbr.rel (%p394) target = $region56
        $region55: #{tpu_custom_call.1} parent=51 // pred_region
          %s397 = sand.u32 %s122, 1
          %s398 = scalar_lea.sflag [#allocation4], %s397
          %s399 = sand.u32 %s122, 1
          %s400 = smul.addr %s399, 8
          %s401 = scalar_lea.vmem [#allocation8], %s400
          %402 = dma.done %s398, 128
        $region56: #{tpu_custom_call.1} parent=51 // pred_fallthru
          _
      $region52: #{tpu_custom_call.1} parent=5 // pred_fallthru
        _
    $region6: #{tpu_custom_call.1} parent=1 // loop_footer
      %s20 = sadd.s32 1, %s16
    $region7: #{tpu_custom_call.1} parent=1 // loop_footer_branch
      %15 = sbr.rel target = $region3
    $region8: #{tpu_custom_call.1} parent=1 // loop_exit
      _
    %403 = vsyncpa [#allocation3], 1
    %s404 = scalar_lea.sflag [#allocation3], 1
    %405 = vsyncpa %s404, 1
    %406 = vsyncpa [#allocation6], 1
    %407 = vsyncpa [#allocation4], 1
    %s408 = scalar_lea.sflag [#allocation4], 1
    %409 = vsyncpa %s408, 1

</llo_original>
